<compile_context>
chip_gen: v7x
topology: tpu7x:2x2x1
jax: 0.10.0
libtpu: 0.0.40
codegen_flags: <defaults>
</compile_context>

<pallas_src>
import jax
import jax.numpy as jnp
from jax.experimental import pallas as pl
from jax.experimental.pallas import tpu as pltpu


def _round_up(n: int, m: int) -> int:
    return ((n + m - 1) // m) * m


def _mlp_kernel(x_ref, w1_ref, b1_ref, w2_ref, b2_ref, o_ref):
    # layer1: (T, D) @ (D, Hp) + (1, Hp).  Pad columns of w1/b1 are zero.
    h = jnp.dot(x_ref[...], w1_ref[...], preferred_element_type=jnp.float32)
    h = jax.nn.sigmoid(h + b1_ref[...])          # padded hidden lanes -> 0.5
    # out: (T, Hp) @ (Hp, D) + (1, D).  Pad ROWS of w2 are zero, so the
    # 0.5-valued padded hidden lanes contribute exactly nothing.
    y = jnp.dot(h, w2_ref[...], preferred_element_type=jnp.float32)
    o_ref[...] = (y + b2_ref[...]).astype(o_ref.dtype)


def prepare_params(w1, b1, w2, b2):
    """Pad the (tiny) weights once, outside the per-call hot path.

    Only the hidden dim H is padded up to a multiple of 128; the activation
    feature dim D stays at its true width so activation HBM traffic is not
    inflated.  Zero pad rows of w2 keep the math exact.
    """
    D, H = w1.shape
    hp = _round_up(H, 128)
    w1p = jnp.pad(w1, ((0, 0), (0, hp - H)))
    b1p = jnp.pad(b1, (0, hp - H)).reshape(1, hp)
    w2p = jnp.pad(w2, ((0, hp - H), (0, 0)))      # pad rows MUST stay zero
    b2p = b2.reshape(1, D)
    return w1p, b1p, w2p, b2p


def segmentation_forward(x, w1p, b1p, w2p, b2p, *, batch_tile=4096):
    """x: (B, D) f32.  w1p: (D, Hp), b1p: (1, Hp), w2p: (Hp, D), b2p: (1, D)."""
    B, D = x.shape
    hp = w1p.shape[1]

    # Batch is padded only up to a multiple of 8 (sublane alignment); the
    # feature dim stays at its true width D (full-array last dim is legal),
    # so there is no activation lane padding and no extra HBM passes.
    B8 = _round_up(max(B, 8), 8)
    xp = x if B8 == B else jnp.pad(x, ((0, B8 - B), (0, 0)))

    if B8 <= batch_tile:
        # Launch-bound regime: a single gridless call, full arrays in VMEM.
        out = pl.pallas_call(
            _mlp_kernel,
            out_shape=jax.ShapeDtypeStruct((B8, D), x.dtype),
        )(xp, w1p, b1p, w2p, b2p)
    else:
        # Tile over the batch with large tiles (amortize the ~0.35us/step grid
        # overhead, >=0.5 MiB DMAs at tile=4096); weights/biases stay resident.
        # Remainder handled by cdiv + Pallas boundary masking (no up-to-2x
        # wasted bandwidth on awkward batch sizes).  grid_n >= 2 here, so the
        # "parallel" batch axis can shard across v7x's 2 TensorCores.
        grid_n = pl.cdiv(B8, batch_tile)
        out = pl.pallas_call(
            _mlp_kernel,
            out_shape=jax.ShapeDtypeStruct((B8, D), x.dtype),
            grid_spec=pl.GridSpec(
                grid=(grid_n,),
                in_specs=[
                    pl.BlockSpec((batch_tile, D), lambda i: (i, 0)),
                    pl.BlockSpec((D, hp), lambda i: (0, 0)),
                    pl.BlockSpec((1, hp), lambda i: (0, 0)),
                    pl.BlockSpec((hp, D), lambda i: (0, 0)),
                    pl.BlockSpec((1, D), lambda i: (0, 0)),
                ],
                out_specs=pl.BlockSpec((batch_tile, D), lambda i: (i, 0)),
            ),
            compiler_params=pltpu.CompilerParams(
                dimension_semantics=("parallel",),
                # ~5 MiB/step at tile=4096 (double-buffered x/out + f32 hidden
                # intermediate).  32 MiB fits every generation (v7x physical is
                # 64 MiB) and lifts v5e's 16 MiB default scoped limit.
                vmem_limit_bytes=32 * 1024 * 1024,
            ),
        )(xp, w1p, b1p, w2p, b2p)

    return out if B8 == B else out[:B]


def _reference(x, w1, b1, w2, b2):
    return jax.nn.sigmoid(x @ w1 + b1) @ w2 + b2


if __name__ == "__main__":
    # Shapes implied by the module: input (batch, dim); hidden = dim + 10.
    dim = 32
    hidden = dim + 10

    key = jax.random.PRNGKey(0)
    kx, k1, k2, k3, k4, kx2 = jax.random.split(key, 6)

    # Deterministic params mimicking nn.Linear's uniform(-1/sqrt(fan_in), ...),
    # stored as (in, out) = transpose of PyTorch's (out, in).
    bound1 = 1.0 / jnp.sqrt(dim)
    bound2 = 1.0 / jnp.sqrt(hidden)
    w1 = jax.random.uniform(k1, (dim, hidden), jnp.float32, -bound1, bound1)
    b1 = jax.random.uniform(k2, (hidden,), jnp.float32, -bound1, bound1)
    w2 = jax.random.uniform(k3, (hidden, dim), jnp.float32, -bound2, bound2)
    b2 = jax.random.uniform(k4, (dim,), jnp.float32, -bound2, bound2)

    # Pad the tiny weights ONCE (outside the per-call hot path).
    params = prepare_params(w1, b1, w2, b2)
    fwd = jax.jit(segmentation_forward)

    # --- small batch: gridless path ---
    batch = 8
    x = jax.random.normal(kx, (batch, dim), dtype=jnp.float32)
    y = jax.block_until_ready(fwd(x, *params))
    y_ref = _reference(x, w1, b1, w2, b2)
    assert y.shape == (batch, dim)
    assert jnp.allclose(y, y_ref, atol=2e-5, rtol=1e-5), "small-batch mismatch"

    # --- large batch with remainder: tiled path (grid = cdiv(10000,4096) = 3,
    #     resident weights, parallel batch axis, boundary-masked last block) ---
    big_batch = 10000
    xb = jax.random.normal(kx2, (big_batch, dim), dtype=jnp.float32)
    yb = jax.block_until_ready(fwd(xb, *params))
    yb_ref = _reference(xb, w1, b1, w2, b2)
    assert yb.shape == (big_batch, dim)
    assert jnp.allclose(yb, yb_ref, atol=2e-5, rtol=1e-5), "large-batch mismatch"

    print("KERNEL_OK")
</pallas_src>

<mosaic_0001>
module attributes {stable_mosaic.version = 11 : i64} {
  func.func @_mlp_kernel(%arg0: memref<8x32xf32, #tpu.memory_space<vmem>>, %arg1: memref<32x128xf32, #tpu.memory_space<vmem>>, %arg2: memref<1x128xf32, #tpu.memory_space<vmem>>, %arg3: memref<128x32xf32, #tpu.memory_space<vmem>>, %arg4: memref<1x32xf32, #tpu.memory_space<vmem>>, %arg5: memref<8x32xf32, #tpu.memory_space<vmem>>) attributes {dimension_semantics = [], scalar_prefetch = 0 : i64, scratch_operands = 0 : i64, tpu.core_type = #tpu.core_type<tc>} {
    %c0 = arith.constant 0 : index
    %c0_0 = arith.constant 0 : index
    %0 = vector.load %arg0[%c0, %c0_0] : memref<8x32xf32, #tpu.memory_space<vmem>>, vector<8x32xf32>
    %c0_1 = arith.constant 0 : index
    %c0_2 = arith.constant 0 : index
    %1 = vector.load %arg1[%c0_1, %c0_2] : memref<32x128xf32, #tpu.memory_space<vmem>>, vector<32x128xf32>
    %cst = arith.constant dense<0.000000e+00> : vector<8x128xf32>
    %2 = tpu.matmul %0, %1, %cst {dimension_numbers = #tpu.dot_dimension_numbers<[1], [0], [0], [1], [0, 0, 1, 1], [], []>} : vector<8x32xf32>, vector<32x128xf32>, vector<8x128xf32> -> vector<8x128xf32>
    %c0_3 = arith.constant 0 : index
    %c0_4 = arith.constant 0 : index
    %3 = vector.load %arg2[%c0_3, %c0_4] : memref<1x128xf32, #tpu.memory_space<vmem>>, vector<1x128xf32>
    %4 = vector.broadcast %3 : vector<1x128xf32> to vector<8x128xf32>
    %5 = arith.addf %2, %4 : vector<8x128xf32>
    %6 = arith.negf %5 : vector<8x128xf32>
    %7 = math.exp %6 : vector<8x128xf32>
    %cst_5 = arith.constant 1.000000e+00 : f32
    %8 = vector.broadcast %cst_5 : f32 to vector<8x128xf32>
    %9 = arith.addf %8, %7 : vector<8x128xf32>
    %10 = arith.divf %8, %9 : vector<8x128xf32>
    %c0_6 = arith.constant 0 : index
    %c0_7 = arith.constant 0 : index
    %11 = vector.load %arg3[%c0_6, %c0_7] : memref<128x32xf32, #tpu.memory_space<vmem>>, vector<128x32xf32>
    %cst_8 = arith.constant dense<0.000000e+00> : vector<8x32xf32>
    %12 = tpu.matmul %10, %11, %cst_8 {dimension_numbers = #tpu.dot_dimension_numbers<[1], [0], [0], [1], [0, 0, 1, 1], [], []>} : vector<8x128xf32>, vector<128x32xf32>, vector<8x32xf32> -> vector<8x32xf32>
    %c0_9 = arith.constant 0 : index
    %c0_10 = arith.constant 0 : index
    %13 = vector.load %arg4[%c0_9, %c0_10] : memref<1x32xf32, #tpu.memory_space<vmem>>, vector<1x32xf32>
    %14 = vector.broadcast %13 : vector<1x32xf32> to vector<8x32xf32>
    %15 = arith.addf %12, %14 : vector<8x32xf32>
    %c0_11 = arith.constant 0 : index
    %c0_12 = arith.constant 0 : index
    %16 = vector.load %arg5[%c0_11, %c0_12] : memref<8x32xf32, #tpu.memory_space<vmem>>, vector<8x32xf32>
    tpu.vector_store %arg5[%c0_11, %c0_12], %15 {strides = array<i32>} : memref<8x32xf32, #tpu.memory_space<vmem>>, vector<8x32xf32>,
    return
  }
}

</mosaic_0001>

<llo_original>
// kernel: segmentation_forward.1
$region0: #{segmentation_forward.1}
  #allocation0 [shape = 'u32[]', space=smem, size = 0x4, offset = 0x4, fixed_abs, tag = 'smem constant byte address 0x4 - core index']
  #allocation1 [shape = 'u32[144,128]{1,0:T(1,128)}', space=vmem, size = 0x12000, scoped, tag = 'internal scratch']
  %s0 = inlined_call_operand.vmem [shape: f32[8,32], index: 0, kind: input, shape index: {}]
  %s1 = inlined_call_operand.vmem [shape: f32[32,128], index: 1, kind: input, shape index: {}]
  %s2 = inlined_call_operand.vmem [shape: f32[1,128], index: 2, kind: input, shape index: {}]
  %s3 = inlined_call_operand.vmem [shape: f32[128,32], index: 3, kind: input, shape index: {}]
  %s4 = inlined_call_operand.vmem [shape: f32[1,32], index: 4, kind: input, shape index: {}]
  %s5 = inlined_call_operand.hbm [shape: f32[8,32], index: 5, kind: output, shape index: {}]
  %s6 = sld [smem:[#allocation0]]
  $region30: #{segmentation_forward.1} parent=0
    _
  %s8 = ssub.s32 1, %s6
  %s9 = scalar_select 0, %s8, %s6
  $region1: #{segmentation_forward.1} parent=0
    #allocation2 [shape = 'u8[4096]{0}', space=vmem, size = 0x1000, scoped, tag = 'output window, operand 0, single buffered']
    #allocation3 [shape = 's32[1]{0}', space=sflag, size = 0x4, scoped, tag = 'scoped memory for segmentation_forward.1']
    %10 = vsyncpa [#allocation3], 0
    // Predicated region
    $region2: #{segmentation_forward.1} parent=1 // pred_check
      _
    $region3: #{segmentation_forward.1} parent=1 // pred_check_branch
      %12 = sbr.rel (0) target = $region5
    $region4: #{segmentation_forward.1} parent=1 // pred_region
      _
    $region5: #{segmentation_forward.1} parent=1 // pred_fallthru
      _
    // Predicated region
    $region6: #{segmentation_forward.1} parent=1 // pred_check
      _
    $region7: #{segmentation_forward.1} parent=1 // pred_check_branch
      %14 = sbr.rel (0) target = $region9
    $region8: #{segmentation_forward.1} parent=1 // pred_region
      _
    $region9: #{segmentation_forward.1} parent=1 // pred_fallthru
      _
    // Predicated region
    $region10: #{segmentation_forward.1} parent=1 // pred_check
      _
    $region11: #{segmentation_forward.1} parent=1 // pred_check_branch
      %16 = sbr.rel (0) target = $region13
    $region12: #{segmentation_forward.1} parent=1 // pred_region
      _
    $region13: #{segmentation_forward.1} parent=1 // pred_fallthru
      _
    // Predicated region
    $region14: #{segmentation_forward.1} parent=1 // pred_check
      _
    $region15: #{segmentation_forward.1} parent=1 // pred_check_branch
      %18 = sbr.rel (0) target = $region17
    $region16: #{segmentation_forward.1} parent=1 // pred_region
      _
    $region17: #{segmentation_forward.1} parent=1 // pred_fallthru
      _
    // Predicated region
    $region18: #{segmentation_forward.1} parent=1 // pred_check
      _
    $region19: #{segmentation_forward.1} parent=1 // pred_check_branch
      %20 = sbr.rel (0) target = $region21
    $region20: #{segmentation_forward.1} parent=1 // pred_region
      _
    $region21: #{segmentation_forward.1} parent=1 // pred_fallthru
      _
    %v21 = vld [vmem:[%s0] sm:$0xff]
    %v22 = vld [vmem:[%s1] sm:$0xff]
    %v23 = vld [vmem:[%s1 + $0x8] sm:$0xff]
    %v24 = vld [vmem:[%s1 + $0x10] sm:$0xff]
    %v25 = vld [vmem:[%s1 + $0x18] sm:$0xff]
    %v26 = vld [vmem:[%s2] sm:$0x1]
    %v28 = vlaneseq
    %v29 = vshrl.u32 %v28, 7
    %v30 = vsub.s32 0, %v29
    %v31 = vrot.slane %v26, %v30
    %vm33 = vcmask 261120
    %v35 = vsel %vm33, %v21, 0
    %37 = vmatprep.subr.mxu0 0.0
    %38 = vmatpush1.msra.mxu0 %v22
    %39 = vmatprep.subr.mxu0 0.0
    %40 = vmatpush1.msra.mxu0 %v23
    %41 = vmatprep.subr.mxu0 0.0
    %42 = vmatpush1.msra.mxu0 %v24
    %43 = vmatprep.subr.mxu0 0.0
    %44 = vmatpush1.msra.mxu0 %v25
    %45 = vmatprep.subr.mxu0 0.0
    %46 = vmatpush1.msra.mxu0 0.0
    %47 = vmatprep.subr.mxu0 0.0
    %48 = vmatpush1.msra.mxu0 0.0
    %49 = vmatprep.subr.mxu0 0.0
    %50 = vmatpush1.msra.mxu0 0.0
    %51 = vmatprep.subr.mxu0 0.0
    %52 = vmatpush1.msra.mxu0 0.0
    %53 = vmatprep.subr.mxu0 0.0
    %54 = vmatpush1.msra.mxu0 0.0
    %55 = vmatprep.subr.mxu0 0.0
    %56 = vmatpush1.msra.mxu0 0.0
    %57 = vmatprep.subr.mxu0 0.0
    %58 = vmatpush1.msra.mxu0 0.0
    %59 = vmatprep.subr.mxu0 0.0
    %60 = vmatpush1.msra.mxu0 0.0
    %61 = vmatprep.subr.mxu0 0.0
    %62 = vmatpush1.msra.mxu0 0.0
    %63 = vmatprep.subr.mxu0 0.0
    %64 = vmatpush1.msra.mxu0 0.0
    %65 = vmatprep.subr.mxu0 0.0
    %66 = vmatpush1.msra.mxu0 0.0
    %67 = vmatprep.subr.mxu0 0.0
    %68 = vmatpush1.msra.mxu0 0.0
    %69 = vmatprep.subr.mxu0 0.0
    %70 = vmatpush1.msra.mxu0 0.0
    %71 = vmatprep.subr.mxu0 0.0
    %72 = vmatpush1.msra.mxu0 0.0
    %73 = vmatprep.subr.mxu0 0.0
    %74 = vmatpush1.msra.mxu0 0.0
    %75 = vmatprep.subr.mxu0 0.0
    %76 = vmatpush1.msra.mxu0 0.0
    %77 = vmatprep.subr.mxu0 0.0
    %78 = vmatpush1.msra.mxu0 0.0
    %79 = vmatprep.subr.mxu0 0.0
    %80 = vmatpush1.msra.mxu0 0.0
    %81 = vmatprep.subr.mxu0 0.0
    %82 = vmatpush1.msra.mxu0 0.0
    %83 = vmatprep.subr.mxu0 0.0
    %84 = vmatpush1.msra.mxu0 0.0
    %85 = vmatprep.subr.mxu0 0.0
    %86 = vmatpush1.msra.mxu0 0.0
    %87 = vmatprep.subr.mxu0 0.0
    %88 = vmatpush1.msra.mxu0 0.0
    %89 = vmatprep.subr.mxu0 0.0
    %90 = vmatpush1.msra.mxu0 0.0
    %91 = vmatprep.subr.mxu0 0.0
    %92 = vmatpush1.msra.mxu0 0.0
    %93 = vmatprep.subr.mxu0 0.0
    %94 = vmatpush1.msra.mxu0 0.0
    %95 = vmatprep.subr.mxu0 0.0
    %96 = vmatpush1.msra.mxu0 0.0
    %97 = vmatprep.subr.mxu0 0.0
    %98 = vmatpush1.msra.mxu0 0.0
    %99 = vmatprep.subr.mxu0 0.0
    %100 = vmatpush1.msra.mxu0 0.0
    %101 = vmatprep.mubr.f32.mxu0 0.0
    %102 = vmatmul.mubr.f32.gmra.mrb[0].mxu0 %v35
    %v103 = vpop.f32.mrb[0].mxu0
    %v104 = vadd.f32 %v31, %v103
    %v105 = vpop.f32.mrb[0].mxu0
    %106 = vdwg.mxu0
    %v107 = vxor.u32 %v104, 2147483648
    %v108 = vmul.f32 %v107, 1.442695
    %v109 = vpow.pop %v108
    %v110 = vadd.f32 %v109, 1.0
    %v111 = vrcp.pop %v110
    %v112 = vmul.f32 1.0, %v111
    %v113 = vld [vmem:[%s3] sm:$0xff]
    %v114 = vld [vmem:[%s3 + $0x8] sm:$0xff]
    %v115 = vld [vmem:[%s3 + $0x10] sm:$0xff]
    %v116 = vld [vmem:[%s3 + $0x18] sm:$0xff]
    %v117 = vld [vmem:[%s3 + $0x20] sm:$0xff]
    %v118 = vld [vmem:[%s3 + $0x28] sm:$0xff]
    %v119 = vld [vmem:[%s3 + $0x30] sm:$0xff]
    %v120 = vld [vmem:[%s3 + $0x38] sm:$0xff]
    %v121 = vld [vmem:[%s3 + $0x40] sm:$0xff]
    %v122 = vld [vmem:[%s3 + $0x48] sm:$0xff]
    %v123 = vld [vmem:[%s3 + $0x50] sm:$0xff]
    %v124 = vld [vmem:[%s3 + $0x58] sm:$0xff]
    %v125 = vld [vmem:[%s3 + $0x60] sm:$0xff]
    %v126 = vld [vmem:[%s3 + $0x68] sm:$0xff]
    %v127 = vld [vmem:[%s3 + $0x70] sm:$0xff]
    %v128 = vld [vmem:[%s3 + $0x78] sm:$0xff]
    %v129 = vld [vmem:[%s4] sm:$0x1]
    %v131 = vlaneseq
    %v132 = vshrl.u32 %v131, 7
    %v133 = vsub.s32 0, %v132
    %v134 = vrot.slane %v129, %v133
    %136 = vmatprep.subr.mxu0 0.0
    %137 = vmatpush1.msra.mxu0 %v113
    %138 = vmatprep.subr.mxu0 0.0
    %139 = vmatpush1.msra.mxu0 %v114
    %140 = vmatprep.subr.mxu0 0.0
    %141 = vmatpush1.msra.mxu0 %v115
    %142 = vmatprep.subr.mxu0 0.0
    %143 = vmatpush1.msra.mxu0 %v116
    %144 = vmatprep.subr.mxu0 0.0
    %145 = vmatpush1.msra.mxu0 %v117
    %146 = vmatprep.subr.mxu0 0.0
    %147 = vmatpush1.msra.mxu0 %v118
    %148 = vmatprep.subr.mxu0 0.0
    %149 = vmatpush1.msra.mxu0 %v119
    %150 = vmatprep.subr.mxu0 0.0
    %151 = vmatpush1.msra.mxu0 %v120
    %152 = vmatprep.subr.mxu0 0.0
    %153 = vmatpush1.msra.mxu0 %v121
    %154 = vmatprep.subr.mxu0 0.0
    %155 = vmatpush1.msra.mxu0 %v122
    %156 = vmatprep.subr.mxu0 0.0
    %157 = vmatpush1.msra.mxu0 %v123
    %158 = vmatprep.subr.mxu0 0.0
    %159 = vmatpush1.msra.mxu0 %v124
    %160 = vmatprep.subr.mxu0 0.0
    %161 = vmatpush1.msra.mxu0 %v125
    %162 = vmatprep.subr.mxu0 0.0
    %163 = vmatpush1.msra.mxu0 %v126
    %164 = vmatprep.subr.mxu0 0.0
    %165 = vmatpush1.msra.mxu0 %v127
    %166 = vmatprep.subr.mxu0 0.0
    %167 = vmatpush1.msra.mxu0 %v128
    %168 = vmatprep.subr.mxu0 0.0
    %169 = vmatpush1.msra.mxu0 0.0
    %170 = vmatprep.subr.mxu0 0.0
    %171 = vmatpush1.msra.mxu0 0.0
    %172 = vmatprep.subr.mxu0 0.0
    %173 = vmatpush1.msra.mxu0 0.0
    %174 = vmatprep.subr.mxu0 0.0
    %175 = vmatpush1.msra.mxu0 0.0
    %176 = vmatprep.subr.mxu0 0.0
    %177 = vmatpush1.msra.mxu0 0.0
    %178 = vmatprep.subr.mxu0 0.0
    %179 = vmatpush1.msra.mxu0 0.0
    %180 = vmatprep.subr.mxu0 0.0
    %181 = vmatpush1.msra.mxu0 0.0
    %182 = vmatprep.subr.mxu0 0.0
    %183 = vmatpush1.msra.mxu0 0.0
    %184 = vmatprep.subr.mxu0 0.0
    %185 = vmatpush1.msra.mxu0 0.0
    %186 = vmatprep.subr.mxu0 0.0
    %187 = vmatpush1.msra.mxu0 0.0
    %188 = vmatprep.subr.mxu0 0.0
    %189 = vmatpush1.msra.mxu0 0.0
    %190 = vmatprep.subr.mxu0 0.0
    %191 = vmatpush1.msra.mxu0 0.0
    %192 = vmatprep.subr.mxu0 0.0
    %193 = vmatpush1.msra.mxu0 0.0
    %194 = vmatprep.subr.mxu0 0.0
    %195 = vmatpush1.msra.mxu0 0.0
    %196 = vmatprep.subr.mxu0 0.0
    %197 = vmatpush1.msra.mxu0 0.0
    %198 = vmatprep.subr.mxu0 0.0
    %199 = vmatpush1.msra.mxu0 0.0
    %200 = vmatprep.mubr.f32.mxu0 0.0
    %201 = vmatmul.mubr.f32.gmra.mrb[0].mxu0 %v112
    %v202 = vpop.f32.mrb[0].mxu0
    %v203 = vadd.f32 %v134, %v202
    %v204 = vpop.f32.mrb[0].mxu0
    %205 = vdwg.mxu0
    %206 = vst.msk [vmem:[#allocation2] sm:$0xff] %vm33, %v203
    // Predicated region
    $region22: #{segmentation_forward.1} parent=1 // pred_check
      _
    $region23: #{segmentation_forward.1} parent=1 // pred_check_branch
      %208 = sbr.rel (0) target = $region25
    $region24: #{segmentation_forward.1} parent=1 // pred_region
      %s210 = ssub.s32 128, 128
      %211 = vsyncadd [#allocation3], %s210
      %s213 = sshll.u32 [#allocation2], 4
      %s214 = int_to_ptr.vmem [resolvable:$true] %s213
      %216 = dma.vmem_to_hbm [thread:$0]  %s214, 128, %s5, [#allocation3]
    $region25: #{segmentation_forward.1} parent=1 // pred_fallthru
      _
    // Predicated region
    $region26: #{segmentation_forward.1} parent=1 // pred_check
      _
    $region27: #{segmentation_forward.1} parent=1 // pred_check_branch
      %218 = sbr.rel (0) target = $region29
    $region28: #{segmentation_forward.1} parent=1 // pred_region
      %219 = dma.done [#allocation3], 128
    $region29: #{segmentation_forward.1} parent=1 // pred_fallthru
      _
    %220 = vsyncpa [#allocation3], 1

</llo_original>
